<compile_context>
chip_gen: v6e
topology: v6e:2x2x1
jax: 0.10.0
libtpu: 0.0.40
codegen_flags: <defaults>
</compile_context>

<pallas_src>
import functools

import jax
import jax.numpy as jnp
from jax.experimental import pallas as pl
from jax.experimental.pallas import tpu as pltpu

EPS = 1e-6
LANES = 128
MAX_TILE_ROWS = 4096  # 4096 x 128 x 4B = 2 MiB per input buffer


def _soft_dice_kernel(x_ref, t_ref, oi_ref, oc_ref, *, r_tile, n_rows, fold):
    """Accumulate per-(channel, batch) partial intersection / cardinality.

    x_ref, t_ref: (r_tile, 128) input tiles (leading b/c dims squeezed).
    oi_ref, oc_ref: (acc_rows, 128) revisited output accumulators.
    """
    k = pl.program_id(2)

    # First reduction step for this (c, b): zero the resident output blocks.
    @pl.when(k == 0)
    def _():
        oi_ref[...] = jnp.zeros_like(oi_ref)
        oc_ref[...] = jnp.zeros_like(oc_ref)

    x = x_ref[...].astype(jnp.float32)
    t = t_ref[...].astype(jnp.float32)

    # sigmoid(x) = 0.5 * (tanh(x/2) + 1): a single EUP transcendental per vreg.
    s = 0.5 * (jnp.tanh(0.5 * x) + 1.0)

    prod = s * t
    card = s + t

    if n_rows % r_tile != 0:
        # The last K-block sticks out past the real rows; Pallas pads the block
        # with unspecified data, so mask it (cheap VPU compare + select).
        rows = jax.lax.broadcasted_iota(jnp.int32, (r_tile, LANES), 0) + k * r_tile
        valid = rows < n_rows
        prod = jnp.where(valid, prod, 0.0)
        card = jnp.where(valid, card, 0.0)

    if fold:
        # Free relayout: vreg g of (r_tile, 128) == slab (g, :, :) of the
        # reshaped view, so the axis-0 sum is pure full-vreg VPU adds (no XLU),
        # collapsing the tile into a single (8, 128) vreg.
        prod = prod.reshape(r_tile // 8, 8, LANES).sum(axis=0)
        card = card.reshape(r_tile // 8, 8, LANES).sum(axis=0)

    oi_ref[...] += prod
    oc_ref[...] += card


def soft_dice_loss(inp, target):
    if inp.shape != target.shape:
        raise ValueError(
            "input and target shapes must be the same. Got: Input:{} Target:{}".format(
                inp.shape, target.shape
            )
        )
    # TODO(synk): the torch module's `input.device == target.device` check has no
    # Pallas equivalent (JAX manages placement); it is intentionally omitted.

    B, C, H, W = inp.shape
    HW = H * W
    R = pl.cdiv(HW, LANES)
    hw_pad = R * LANES

    # Contiguous (free) reshape; no transpose, no dtype upcast before the DMA.
    x = inp.reshape(B, C, HW)
    t = target.reshape(B, C, HW)
    if hw_pad != HW:
        # Only the lane tail of the last row needs padding (required by the
        # lane-dense reshape). sigmoid(-1e9) == 0 and target 0 contribute
        # nothing to either sum.
        x = jnp.pad(x, ((0, 0), (0, 0), (0, hw_pad - HW)), constant_values=-1e9)
        t = jnp.pad(t, ((0, 0), (0, 0), (0, hw_pad - HW)), constant_values=0)
    x = x.reshape(B, C, R, LANES)
    t = t.reshape(B, C, R, LANES)

    # Tile selection: full extent when small (no (8,128) divisibility needed),
    # otherwise a large multiple-of-8 tile; partial last block masked in-kernel.
    r_tile = R if R <= MAX_TILE_ROWS else MAX_TILE_ROWS
    kt = pl.cdiv(R, r_tile)
    fold = (r_tile % 8 == 0) and (r_tile >= 8)
    acc_rows = 8 if fold else r_tile

    kernel = functools.partial(
        _soft_dice_kernel, r_tile=r_tile, n_rows=R, fold=fold
    )

    elems = B * C * R * LANES
    out_elems = C * B * acc_rows * LANES
    cost = pl.CostEstimate(
        flops=8 * elems,
        transcendentals=elems,
        bytes_accessed=2 * elems * inp.dtype.itemsize + 2 * out_elems * 4,
    )

    out_i, out_c = pl.pallas_call(
        kernel,
        out_shape=(
            jax.ShapeDtypeStruct((C, B, acc_rows, LANES), jnp.float32),
            jax.ShapeDtypeStruct((C, B, acc_rows, LANES), jnp.float32),
        ),
        grid_spec=pltpu.PrefetchScalarGridSpec(
            num_scalar_prefetch=0,
            grid=(C, B, kt),  # parallel, parallel, reduction last
            in_specs=[
                pl.BlockSpec((None, None, r_tile, LANES), lambda c, b, k: (b, c, k, 0)),
                pl.BlockSpec((None, None, r_tile, LANES), lambda c, b, k: (b, c, k, 0)),
            ],
            out_specs=(
                pl.BlockSpec((None, None, acc_rows, LANES), lambda c, b, k: (c, b, 0, 0)),
                pl.BlockSpec((None, None, acc_rows, LANES), lambda c, b, k: (c, b, 0, 0)),
            ),
        ),
        compiler_params=pltpu.CompilerParams(
            dimension_semantics=("parallel", "parallel", "arbitrary"),
            vmem_limit_bytes=32 * 1024 * 1024,
        ),
        cost_estimate=cost,
    )(x, t)

    # Tiny finish in JAX: per-channel sums, dice and the uniform channel mean.
    inter = jnp.sum(out_i, axis=(1, 2, 3))  # (C,)
    card = jnp.sum(out_c, axis=(1, 2, 3))   # (C,)
    dice = 2.0 * inter / (card + EPS)
    return jnp.mean(1.0 - dice)


def _soft_dice_loss_ref(inp, target):
    s = jax.nn.sigmoid(inp.astype(jnp.float32))
    t = target.astype(jnp.float32)
    inter = jnp.sum(s * t, axis=(0, 2, 3))
    card = jnp.sum(s + t, axis=(0, 2, 3))
    dice = 2.0 * inter / (card + EPS)
    return jnp.mean(1.0 - dice)


if __name__ == "__main__":
    key = jax.random.PRNGKey(0)
    k_in, k_tg = jax.random.split(key)

    B, C, H, W = 2, 4, 16, 16
    x = jax.random.normal(k_in, (B, C, H, W), dtype=jnp.float32)
    # target: binary masks as float (typical dice usage)
    tgt = jax.random.bernoulli(k_tg, p=0.4, shape=(B, C, H, W)).astype(jnp.float32)

    loss = jax.block_until_ready(soft_dice_loss(x, tgt))
    ref = jax.block_until_ready(_soft_dice_loss_ref(x, tgt))
    assert jnp.allclose(loss, ref, rtol=1e-5, atol=1e-6), (loss, ref)

    print("KERNEL_OK")
</pallas_src>

<mosaic_0001>
module attributes {stable_mosaic.version = 11 : i64} {
  func.func @_soft_dice_kernel(%arg0: i32, %arg1: i32, %arg2: i32, %arg3: memref<1x1x2x128xf32, #tpu.memory_space<vmem>>, %arg4: memref<1x1x2x128xf32, #tpu.memory_space<vmem>>, %arg5: memref<1x1x2x128xf32, #tpu.memory_space<vmem>>, %arg6: memref<1x1x2x128xf32, #tpu.memory_space<vmem>>) attributes {dimension_semantics = [#tpu.dimension_semantics<parallel>, #tpu.dimension_semantics<parallel>, #tpu.dimension_semantics<arbitrary>], iteration_bounds = array<i64: 4, 2, 1>, scalar_prefetch = 0 : i64, scratch_operands = 0 : i64, tpu.core_type = #tpu.core_type<tc>, window_params = [{transform_indices = @transform_0, window_bounds = array<i64: 1, 1, 2, 128>}, {transform_indices = @transform_1, window_bounds = array<i64: 1, 1, 2, 128>}, {transform_indices = @transform_2, window_bounds = array<i64: 1, 1, 2, 128>}, {transform_indices = @transform_3, window_bounds = array<i64: 1, 1, 2, 128>}]} {
    %c0_i32 = arith.constant 0 : i32
    %0 = arith.cmpi eq, %arg2, %c0_i32 : i32
    %1 = arith.extui %0 : i1 to i32
    %c0_i32_0 = arith.constant 0 : i32
    %2 = arith.cmpi ne, %1, %c0_i32_0 : i32
    scf.if %2 {
      %cst_26 = arith.constant 0.000000e+00 : f32
      %28 = vector.broadcast %cst_26 : f32 to vector<2x128xf32>
      %c0_27 = arith.constant 0 : index
      %c0_28 = arith.constant 0 : index
      %c0_29 = arith.constant 0 : index
      %c0_30 = arith.constant 0 : index
      %29 = vector.load %arg5[%c0_27, %c0_28, %c0_29, %c0_30] : memref<1x1x2x128xf32, #tpu.memory_space<vmem>>, vector<1x1x2x128xf32>
      %30 = vector.shape_cast %29 : vector<1x1x2x128xf32> to vector<2x128xf32>
      %31 = vector.shape_cast %28 : vector<2x128xf32> to vector<1x1x2x128xf32>
      tpu.vector_store %arg5[%c0_27, %c0_28, %c0_29, %c0_30], %31 {strides = array<i32>} : memref<1x1x2x128xf32, #tpu.memory_space<vmem>>, vector<1x1x2x128xf32>,
      %cst_31 = arith.constant 0.000000e+00 : f32
      %32 = vector.broadcast %cst_31 : f32 to vector<2x128xf32>
      %c0_32 = arith.constant 0 : index
      %c0_33 = arith.constant 0 : index
      %c0_34 = arith.constant 0 : index
      %c0_35 = arith.constant 0 : index
      %33 = vector.load %arg6[%c0_32, %c0_33, %c0_34, %c0_35] : memref<1x1x2x128xf32, #tpu.memory_space<vmem>>, vector<1x1x2x128xf32>
      %34 = vector.shape_cast %33 : vector<1x1x2x128xf32> to vector<2x128xf32>
      %35 = vector.shape_cast %32 : vector<2x128xf32> to vector<1x1x2x128xf32>
      tpu.vector_store %arg6[%c0_32, %c0_33, %c0_34, %c0_35], %35 {strides = array<i32>} : memref<1x1x2x128xf32, #tpu.memory_space<vmem>>, vector<1x1x2x128xf32>,
    } else {
    }
    %c0 = arith.constant 0 : index
    %c0_1 = arith.constant 0 : index
    %c0_2 = arith.constant 0 : index
    %c0_3 = arith.constant 0 : index
    %3 = vector.load %arg3[%c0, %c0_1, %c0_2, %c0_3] : memref<1x1x2x128xf32, #tpu.memory_space<vmem>>, vector<1x1x2x128xf32>
    %4 = vector.shape_cast %3 : vector<1x1x2x128xf32> to vector<2x128xf32>
    %c0_4 = arith.constant 0 : index
    %c0_5 = arith.constant 0 : index
    %c0_6 = arith.constant 0 : index
    %c0_7 = arith.constant 0 : index
    %5 = vector.load %arg4[%c0_4, %c0_5, %c0_6, %c0_7] : memref<1x1x2x128xf32, #tpu.memory_space<vmem>>, vector<1x1x2x128xf32>
    %6 = vector.shape_cast %5 : vector<1x1x2x128xf32> to vector<2x128xf32>
    %cst = arith.constant 5.000000e-01 : f32
    %7 = vector.broadcast %cst : f32 to vector<2x128xf32>
    %8 = arith.mulf %7, %4 : vector<2x128xf32>
    %9 = math.tanh %8 : vector<2x128xf32>
    %cst_8 = arith.constant 1.000000e+00 : f32
    %10 = vector.broadcast %cst_8 : f32 to vector<2x128xf32>
    %11 = arith.addf %9, %10 : vector<2x128xf32>
    %cst_9 = arith.constant 5.000000e-01 : f32
    %12 = vector.broadcast %cst_9 : f32 to vector<2x128xf32>
    %13 = arith.mulf %12, %11 : vector<2x128xf32>
    %14 = arith.mulf %13, %6 : vector<2x128xf32>
    %15 = arith.addf %13, %6 : vector<2x128xf32>
    %c0_10 = arith.constant 0 : index
    %c0_11 = arith.constant 0 : index
    %c0_12 = arith.constant 0 : index
    %c0_13 = arith.constant 0 : index
    %16 = vector.load %arg5[%c0_10, %c0_11, %c0_12, %c0_13] : memref<1x1x2x128xf32, #tpu.memory_space<vmem>>, vector<1x1x2x128xf32>
    %17 = vector.shape_cast %16 : vector<1x1x2x128xf32> to vector<2x128xf32>
    %18 = arith.addf %17, %14 : vector<2x128xf32>
    %c0_14 = arith.constant 0 : index
    %c0_15 = arith.constant 0 : index
    %c0_16 = arith.constant 0 : index
    %c0_17 = arith.constant 0 : index
    %19 = vector.load %arg5[%c0_14, %c0_15, %c0_16, %c0_17] : memref<1x1x2x128xf32, #tpu.memory_space<vmem>>, vector<1x1x2x128xf32>
    %20 = vector.shape_cast %19 : vector<1x1x2x128xf32> to vector<2x128xf32>
    %21 = vector.shape_cast %18 : vector<2x128xf32> to vector<1x1x2x128xf32>
    tpu.vector_store %arg5[%c0_14, %c0_15, %c0_16, %c0_17], %21 {strides = array<i32>} : memref<1x1x2x128xf32, #tpu.memory_space<vmem>>, vector<1x1x2x128xf32>,
    %c0_18 = arith.constant 0 : index
    %c0_19 = arith.constant 0 : index
    %c0_20 = arith.constant 0 : index
    %c0_21 = arith.constant 0 : index
    %22 = vector.load %arg6[%c0_18, %c0_19, %c0_20, %c0_21] : memref<1x1x2x128xf32, #tpu.memory_space<vmem>>, vector<1x1x2x128xf32>
    %23 = vector.shape_cast %22 : vector<1x1x2x128xf32> to vector<2x128xf32>
    %24 = arith.addf %23, %15 : vector<2x128xf32>
    %c0_22 = arith.constant 0 : index
    %c0_23 = arith.constant 0 : index
    %c0_24 = arith.constant 0 : index
    %c0_25 = arith.constant 0 : index
    %25 = vector.load %arg6[%c0_22, %c0_23, %c0_24, %c0_25] : memref<1x1x2x128xf32, #tpu.memory_space<vmem>>, vector<1x1x2x128xf32>
    %26 = vector.shape_cast %25 : vector<1x1x2x128xf32> to vector<2x128xf32>
    %27 = vector.shape_cast %24 : vector<2x128xf32> to vector<1x1x2x128xf32>
    tpu.vector_store %arg6[%c0_22, %c0_23, %c0_24, %c0_25], %27 {strides = array<i32>} : memref<1x1x2x128xf32, #tpu.memory_space<vmem>>, vector<1x1x2x128xf32>,
    return
  }
  func.func @transform_0(%arg0: i32, %arg1: i32, %arg2: i32) -> (i32, i32, i32, i32) {
    %c0_i32 = arith.constant 0 : i32
    %c0_i32_0 = arith.constant 0 : i32
    return %arg1, %arg0, %arg2, %c0_i32 : i32, i32, i32, i32
  }
  func.func @transform_1(%arg0: i32, %arg1: i32, %arg2: i32) -> (i32, i32, i32, i32) {
    %c0_i32 = arith.constant 0 : i32
    %c0_i32_0 = arith.constant 0 : i32
    return %arg1, %arg0, %arg2, %c0_i32 : i32, i32, i32, i32
  }
  func.func @transform_2(%arg0: i32, %arg1: i32, %arg2: i32) -> (i32, i32, i32, i32) {
    %c0_i32 = arith.constant 0 : i32
    %c0_i32_0 = arith.constant 0 : i32
    %c0_i32_1 = arith.constant 0 : i32
    return %arg0, %arg1, %c0_i32, %c0_i32_0 : i32, i32, i32, i32
  }
  func.func @transform_3(%arg0: i32, %arg1: i32, %arg2: i32) -> (i32, i32, i32, i32) {
    %c0_i32 = arith.constant 0 : i32
    %c0_i32_0 = arith.constant 0 : i32
    %c0_i32_1 = arith.constant 0 : i32
    return %arg0, %arg1, %c0_i32, %c0_i32_0 : i32, i32, i32, i32
  }
}

</mosaic_0001>

<llo_original>
// kernel: tpu_custom_call.1
$region0: #{tpu_custom_call.1}
  #allocation0 [shape = 'u32[]', space=smem, size = 0x4, offset = 0x4, fixed_abs, tag = 'smem constant byte address 0x4 - core index']
  #allocation1 [shape = 'u32[144,128]{1,0:T(1,128)}', space=vmem, size = 0x12000, scoped, tag = 'internal scratch']
  %s0 = inlined_call_operand.hbm [shape: f32[2,4,2,128], index: 0, kind: input, shape index: {}]
  %s1 = inlined_call_operand.hbm [shape: f32[2,4,2,128], index: 1, kind: input, shape index: {}]
  %s2 = inlined_call_operand.hbm [shape: f32[4,2,2,128], index: 2, kind: output, shape index: {0}]
  %s3 = inlined_call_operand.hbm [shape: f32[4,2,2,128], index: 3, kind: output, shape index: {1}]
  %4 = xla_tuple %s2, %s3
  %s5 = sld [smem:[#allocation0]]
  $region61: #{tpu_custom_call.1} parent=0
    _
  %s7 = ssub.s32 1, %s5
  %s8 = scalar_select 0, %s7, %s5
  $region1: #{tpu_custom_call.1} parent=0
    #allocation2 [shape = 'u8[2048]{0}', space=vmem, size = 0x800, scoped, tag = 'input window, operand 0']
    #allocation3 [shape = 's32[2]{0}', space=sflag, size = 0x8, scoped, tag = 'scoped memory for tpu_custom_call.1']
    #allocation4 [shape = 's32[2]{0}', space=sflag, size = 0x8, scoped, tag = 'scoped memory for tpu_custom_call.1']
    #allocation5 [shape = 'u8[2048]{0}', space=vmem, size = 0x800, scoped, tag = 'input window, operand 1']
    #allocation6 [shape = 's32[2]{0}', space=sflag, size = 0x8, scoped, tag = 'scoped memory for tpu_custom_call.1']
    #allocation7 [shape = 'u8[2048]{0}', space=vmem, size = 0x800, scoped, tag = 'output window, operand 0']
    #allocation8 [shape = 'u8[2048]{0}', space=vmem, size = 0x800, scoped, tag = 'output window, operand 1']
    #allocation9 [shape = 's32[2]{0}', space=sflag, size = 0x8, scoped, tag = 'scoped memory for tpu_custom_call.1']
    %9 = vsyncpa [#allocation3], 0
    %s10 = scalar_lea.sflag [#allocation3], 1
    %11 = vsyncpa %s10, 0
    %12 = vsyncpa [#allocation6], 0
    %s13 = scalar_lea.sflag [#allocation6], 1
    %14 = vsyncpa %s13, 0
    %15 = vsyncpa [#allocation4], 0
    %s16 = scalar_lea.sflag [#allocation4], 1
    %17 = vsyncpa %s16, 0
    %18 = vsyncpa [#allocation9], 0
    %s19 = scalar_lea.sflag [#allocation9], 1
    %20 = vsyncpa %s19, 0
    loop: start=0, step=1, limit=10
    $region2: #{tpu_custom_call.1} parent=1 // loop_pre_header
      _
    $region3: #{tpu_custom_call.1} parent=1 // loop_header
      %s22 = sphi 0, %s26
      %p23 = scmp.ge.s32.totalorder %s22, 10
      %s29 = sphi 0, %s48
      %s30 = sphi 0, %s44
      %s31 = sphi 0, %s40
      %s32 = sphi 0, %s29
      %s33 = sphi 0, %s30
      %s34 = sphi 0, %s31
      %s35 = sphi 0, %s32
      %s36 = sphi 0, %s33
      %s37 = sphi 0, %s34
      %s55 = sphi 0, %s57
      %s58 = sphi 0, %s55
      %s59 = sphi 0, %s58
      %s75 = sphi 0, %s59
      %s85 = sphi 0, %s87
      %s88 = sphi 0, %s85
      %s89 = sphi 0, %s88
      %s105 = sphi 0, %s89
      %s113 = sphi 0, %s115
      %s116 = sphi 0, %s113
      %s117 = sphi 0, %s116
      %s133 = sphi 0, %s117
      %s141 = sphi 0, %s143
      %s144 = sphi 0, %s141
      %s145 = sphi 0, %s144
      %s161 = sphi 0, %s145
    $region4: #{tpu_custom_call.1} parent=1 // loop_header_branch
      %25 = sbr.rel (%p23) target = $region8
    $region5: #{tpu_custom_call.1} parent=1 // loop_body
      %s27 = ssub.s32 %s22, 1
      %s28 = ssub.s32 %s22, 2
      %s38 = sadd.s32 1, %s31
      %p39 = scmp.ge.s32.totalorder %s38, 1
      %s40 = scalar_select %p39, 0, %s38
      %s41 = sadd.s32 1, %s30
      %s42 = scalar_select %p39, %s41, %s30
      %p43 = scmp.ge.s32.totalorder %s42, 2
      %s44 = scalar_select %p43, 0, %s42
      %s45 = sadd.s32 1, %s29
      %s46 = scalar_select %p43, %s45, %s29
      %p47 = scmp.ge.s32.totalorder %s46, 4
      %s48 = scalar_select %p47, 0, %s46
      %s49 = ssub.s32 %s30, %s44
      %s50 = ssub.s32 %s29, %s48
      %s51 = sor.u32 %s49, %s50
      %s52 = ssub.s32 %s31, %s40
      %s53 = sor.u32 %s51, %s52
      %p54 = scmp.eq.s32.totalorder %s53, 0
      %s56 = sadd.s32 %s55, 1
      %s57 = scalar_select %p54, %s55, %s56
      %p60 = pneg %p54
      %p61 = scmp.eq.s32.totalorder %s22, 7
      %p62 = por %p60, %p61
      %p63 = scmp.ne.s32.totalorder %s55, %s58
      %p64 = scmp.eq.s32.totalorder %s22, 0
      %p65 = por %p63, %p64
      %p66 = scmp.ne.s32.totalorder %s55, %s58
      %p67 = scmp.eq.s32.totalorder %s27, 7
      %p68 = por %p66, %p67
      %p69 = scmp.ne.s32.totalorder %s58, %s59
      %p70 = scmp.eq.s32.totalorder %s27, 0
      %p71 = por %p69, %p70
      %p72 = scmp.ne.s32.totalorder %s58, %s59
      %p73 = scmp.eq.s32.totalorder %s28, 7
      %p74 = por %p72, %p73
      %p76 = scmp.ne.s32.totalorder %s59, %s75
      %p77 = scmp.eq.s32.totalorder %s28, 0
      %p78 = por %p76, %p77
      %s79 = ssub.s32 %s30, %s44
      %s80 = ssub.s32 %s29, %s48
      %s81 = sor.u32 %s79, %s80
      %s82 = ssub.s32 %s31, %s40
      %s83 = sor.u32 %s81, %s82
      %p84 = scmp.eq.s32.totalorder %s83, 0
      %s86 = sadd.s32 %s85, 1
      %s87 = scalar_select %p84, %s85, %s86
      %p90 = pneg %p84
      %p91 = scmp.eq.s32.totalorder %s22, 7
      %p92 = por %p90, %p91
      %p93 = scmp.ne.s32.totalorder %s85, %s88
      %p94 = scmp.eq.s32.totalorder %s22, 0
      %p95 = por %p93, %p94
      %p96 = scmp.ne.s32.totalorder %s85, %s88
      %p97 = scmp.eq.s32.totalorder %s27, 7
      %p98 = por %p96, %p97
      %p99 = scmp.ne.s32.totalorder %s88, %s89
      %p100 = scmp.eq.s32.totalorder %s27, 0
      %p101 = por %p99, %p100
      %p102 = scmp.ne.s32.totalorder %s88, %s89
      %p103 = scmp.eq.s32.totalorder %s28, 7
      %p104 = por %p102, %p103
      %p106 = scmp.ne.s32.totalorder %s89, %s105
      %p107 = scmp.eq.s32.totalorder %s28, 0
      %p108 = por %p106, %p107
      %s109 = ssub.s32 %s29, %s48
      %s110 = ssub.s32 %s30, %s44
      %s111 = sor.u32 %s109, %s110
      %p112 = scmp.eq.s32.totalorder %s111, 0
      %s114 = sadd.s32 %s113, 1
      %s115 = scalar_select %p112, %s113, %s114
      %p118 = pneg %p112
      %p119 = scmp.eq.s32.totalorder %s22, 7
      %p120 = por %p118, %p119
      %p121 = scmp.ne.s32.totalorder %s113, %s116
      %p122 = scmp.eq.s32.totalorder %s22, 0
      %p123 = por %p121, %p122
      %p124 = scmp.ne.s32.totalorder %s113, %s116
      %p125 = scmp.eq.s32.totalorder %s27, 7
      %p126 = por %p124, %p125
      %p127 = scmp.ne.s32.totalorder %s116, %s117
      %p128 = scmp.eq.s32.totalorder %s27, 0
      %p129 = por %p127, %p128
      %p130 = scmp.ne.s32.totalorder %s116, %s117
      %p131 = scmp.eq.s32.totalorder %s28, 7
      %p132 = por %p130, %p131
      %p134 = scmp.ne.s32.totalorder %s117, %s133
      %p135 = scmp.eq.s32.totalorder %s28, 0
      %p136 = por %p134, %p135
      %s137 = ssub.s32 %s29, %s48
      %s138 = ssub.s32 %s30, %s44
      %s139 = sor.u32 %s137, %s138
      %p140 = scmp.eq.s32.totalorder %s139, 0
      %s142 = sadd.s32 %s141, 1
      %s143 = scalar_select %p140, %s141, %s142
      %p146 = pneg %p140
      %p147 = scmp.eq.s32.totalorder %s22, 7
      %p148 = por %p146, %p147
      %p149 = scmp.ne.s32.totalorder %s141, %s144
      %p150 = scmp.eq.s32.totalorder %s22, 0
      %p151 = por %p149, %p150
      %p152 = scmp.ne.s32.totalorder %s141, %s144
      %p153 = scmp.eq.s32.totalorder %s27, 7
      %p154 = por %p152, %p153
      %p155 = scmp.ne.s32.totalorder %s144, %s145
      %p156 = scmp.eq.s32.totalorder %s27, 0
      %p157 = por %p155, %p156
      %p158 = scmp.ne.s32.totalorder %s144, %s145
      %p159 = scmp.eq.s32.totalorder %s28, 7
      %p160 = por %p158, %p159
      %p162 = scmp.ne.s32.totalorder %s145, %s161
      %p163 = scmp.eq.s32.totalorder %s28, 0
      %p164 = por %p162, %p163
      %p165 = scmp.le.s32.totalorder 1, %s22
      %p166 = scmp.lt.s32.totalorder %s22, 9
      %p167 = pnand %p165, %p166
      %p168 = pneg %p167
      // Predicated region
      $region9: #{tpu_custom_call.1} parent=5 // pred_check
        _
      $region10: #{tpu_custom_call.1} parent=5 // pred_check_branch
        %170 = sbr.rel (%p167) target = $region12
      $region11: #{tpu_custom_call.1} parent=5 // pred_region
        %s171 = ssub.s32 %s22, 1
      $region12: #{tpu_custom_call.1} parent=5 // pred_fallthru
        _
      %p172 = scmp.lt.s32.totalorder %s22, 8
      // Predicated region
      $region13: #{tpu_custom_call.1} parent=5 // pred_check
        %p173 = pneg %p172
      $region14: #{tpu_custom_call.1} parent=5 // pred_check_branch
        %175 = sbr.rel (%p173) target = $region16
      $region15: #{tpu_custom_call.1} parent=5 // pred_region
        // Predicated region
        $region17: #{tpu_custom_call.1} parent=15 // pred_check
          %p176 = pneg %p65
        $region18: #{tpu_custom_call.1} parent=15 // pred_check_branch
          %178 = sbr.rel (%p176) target = $region20
        $region19: #{tpu_custom_call.1} parent=15 // pred_region
          %s179 = sand.u32 %s55, 1
          %s180 = scalar_lea.sflag [#allocation3], %s179
          %s181 = sand.u32 %s55, 1
          %s182 = smul.addr %s181, 2
          %s183 = scalar_lea.vmem [#allocation2], %s182
          %s185 = ssub.s32 32, 32
          %186 = vsyncadd %s180, %s185
          %s187 = sadd.s32 %s31, %s29
          %s188 = smul.addr %s30, 4
          %s189 = sadd.s32 %s187, %s188
          %s190 = smul.addr %s189, 32
          %s191 = scalar_lea.hbm %s0, %s190
          %s193 = sshll.u32 %s183, 4
          %s194 = int_to_ptr.vmem [resolvable:$true] %s193
          %196 = dma.hbm_to_vmem [thread:$0]  %s191, 32, %s194, %s180
        $region20: #{tpu_custom_call.1} parent=15 // pred_fallthru
          _
        // Predicated region
        $region21: #{tpu_custom_call.1} parent=15 // pred_check
          %p197 = pneg %p95
        $region22: #{tpu_custom_call.1} parent=15 // pred_check_branch
          %199 = sbr.rel (%p197) target = $region24
        $region23: #{tpu_custom_call.1} parent=15 // pred_region
          %s200 = sand.u32 %s85, 1
          %s201 = scalar_lea.sflag [#allocation6], %s200
          %s202 = sand.u32 %s85, 1
          %s203 = smul.addr %s202, 2
          %s204 = scalar_lea.vmem [#allocation5], %s203
          %s206 = ssub.s32 32, 32
          %207 = vsyncadd %s201, %s206
          %s208 = sadd.s32 %s31, %s29
          %s209 = smul.addr %s30, 4
          %s210 = sadd.s32 %s208, %s209
          %s211 = smul.addr %s210, 32
          %s212 = scalar_lea.hbm %s1, %s211
          %s214 = sshll.u32 %s204, 4
          %s215 = int_to_ptr.vmem [resolvable:$true] %s214
          %217 = dma.hbm_to_vmem [thread:$0]  %s212, 32, %s215, %s201
        $region24: #{tpu_custom_call.1} parent=15 // pred_fallthru
          _
      $region16: #{tpu_custom_call.1} parent=5 // pred_fallthru
        _
      %p218 = scmp.le.s32.totalorder 1, %s22
      %p219 = scmp.lt.s32.totalorder %s22, 9
      %p220 = pnand %p218, %p219
      %p221 = pneg %p220
      // Predicated region
      $region25: #{tpu_custom_call.1} parent=5 // pred_check
        _
      $region26: #{tpu_custom_call.1} parent=5 // pred_check_branch
        %223 = sbr.rel (%p220) target = $region28
      $region27: #{tpu_custom_call.1} parent=5 // pred_region
        %s224 = ssub.s32 %s22, 1
        %s225 = sand.u32 %s58, 1
        %s226 = scalar_lea.sflag [#allocation3], %s225
        %s227 = sand.u32 %s58, 1
        %s228 = smul.addr %s227, 2
        %s229 = scalar_lea.vmem [#allocation2], %s228
        // Predicated region
        $region29: #{tpu_custom_call.1} parent=27 // pred_check
          %p230 = pneg %p71
        $region30: #{tpu_custom_call.1} parent=27 // pred_check_branch
          %232 = sbr.rel (%p230) target = $region32
        $region31: #{tpu_custom_call.1} parent=27 // pred_region
          %233 = dma.done %s226, 32
        $region32: #{tpu_custom_call.1} parent=27 // pred_fallthru
          _
        %s234 = sand.u32 %s88, 1
        %s235 = scalar_lea.sflag [#allocation6], %s234
        %s236 = sand.u32 %s88, 1
        %s237 = smul.addr %s236, 2
        %s238 = scalar_lea.vmem [#allocation5], %s237
        // Predicated region
        $region33: #{tpu_custom_call.1} parent=27 // pred_check
          %p239 = pneg %p101
        $region34: #{tpu_custom_call.1} parent=27 // pred_check_branch
          %241 = sbr.rel (%p239) target = $region36
        $region35: #{tpu_custom_call.1} parent=27 // pred_region
          %242 = dma.done %s235, 32
        $region36: #{tpu_custom_call.1} parent=27 // pred_fallthru
          _
        %s243 = sand.u32 %s58, 1
        %s244 = scalar_lea.sflag [#allocation3], %s243
        %s245 = sand.u32 %s58, 1
        %s246 = smul.addr %s245, 2
        %s247 = scalar_lea.vmem [#allocation2], %s246
        %p248 = pneg %p71
        %p249 = pneg %p68
        %s250 = sand.u32 %s88, 1
        %s251 = scalar_lea.sflag [#allocation6], %s250
        %s252 = sand.u32 %s88, 1
        %s253 = smul.addr %s252, 2
        %s254 = scalar_lea.vmem [#allocation5], %s253
        %p255 = pneg %p101
        %p256 = pneg %p98
        %p257 = pneg %p129
        %p258 = pneg %p126
        %s259 = sand.u32 %s116, 1
        %s260 = scalar_lea.sflag [#allocation4], %s259
        %s261 = sand.u32 %s116, 1
        %s262 = smul.addr %s261, 2
        %s263 = scalar_lea.vmem [#allocation7], %s262
        %p264 = pneg %p157
        %p265 = pneg %p154
        %s266 = sand.u32 %s144, 1
        %s267 = scalar_lea.sflag [#allocation9], %s266
        %s268 = sand.u32 %s144, 1
        %s269 = smul.addr %s268, 2
        %s270 = scalar_lea.vmem [#allocation8], %s269
        %p271 = scmp.eq.s32.totalorder %s34, 0
        // Predicated region
        $region37: #{tpu_custom_call.1} parent=27 // pred_check
          %p272 = pneg %p271
        $region38: #{tpu_custom_call.1} parent=27 // pred_check_branch
          %274 = sbr.rel (%p272) target = $region40
        $region39: #{tpu_custom_call.1} parent=27 // pred_region
          %275 = vst [vmem:[%s263] sm:$0x3] 0.0
          %276 = vst [vmem:[%s270] sm:$0x3] 0.0
        $region40: #{tpu_custom_call.1} parent=27 // pred_fallthru
          _
        %v277 = vld [vmem:[%s229] sm:$0x3]
        %v278 = vld [vmem:[%s238] sm:$0x3]
        %v279 = vmul.f32 %v277, 0.5
        %v280 = vtanh.pop %v279
        %v281 = vadd.f32 %v280, 1.0
        %v282 = vmul.f32 %v281, 0.5
        %v283 = vmul.f32 %v282, %v278
        %v284 = vadd.f32 %v282, %v278
        %v285 = vld [vmem:[%s263] sm:$0x3]
        %v286 = vadd.f32 %v285, %v283
        %287 = vst [vmem:[%s263] sm:$0x3] %v286
        %v288 = vld [vmem:[%s270] sm:$0x3]
        %v289 = vadd.f32 %v288, %v284
        %290 = vst [vmem:[%s270] sm:$0x3] %v289
        %s291 = sand.u32 %s116, 1
        %s292 = scalar_lea.sflag [#allocation4], %s291
        %s293 = sand.u32 %s116, 1
        %s294 = smul.addr %s293, 2
        %s295 = scalar_lea.vmem [#allocation7], %s294
        %s296 = sand.u32 %s144, 1
        %s297 = scalar_lea.sflag [#allocation9], %s296
        %s298 = sand.u32 %s144, 1
        %s299 = smul.addr %s298, 2
        %s300 = scalar_lea.vmem [#allocation8], %s299
        // Predicated region
        $region41: #{tpu_custom_call.1} parent=27 // pred_check
          %p301 = pneg %p126
        $region42: #{tpu_custom_call.1} parent=27 // pred_check_branch
          %303 = sbr.rel (%p301) target = $region44
        $region43: #{tpu_custom_call.1} parent=27 // pred_region
          %s305 = ssub.s32 32, 32
          %306 = vsyncadd %s292, %s305
          %s307 = smul.addr %s32, 2
          %s308 = sadd.s32 %s33, %s307
          %s309 = smul.addr %s308, 32
          %s310 = scalar_lea.hbm %s2, %s309
          %s312 = sshll.u32 %s295, 4
          %s313 = int_to_ptr.vmem [resolvable:$true] %s312
          %315 = dma.vmem_to_hbm [thread:$0]  %s313, 32, %s310, %s292
        $region44: #{tpu_custom_call.1} parent=27 // pred_fallthru
          _
        // Predicated region
        $region45: #{tpu_custom_call.1} parent=27 // pred_check
          %p316 = pneg %p154
        $region46: #{tpu_custom_call.1} parent=27 // pred_check_branch
          %318 = sbr.rel (%p316) target = $region48
        $region47: #{tpu_custom_call.1} parent=27 // pred_region
          %s320 = ssub.s32 32, 32
          %321 = vsyncadd %s297, %s320
          %s322 = smul.addr %s32, 2
          %s323 = sadd.s32 %s33, %s322
          %s324 = smul.addr %s323, 32
          %s325 = scalar_lea.hbm %s3, %s324
          %s327 = sshll.u32 %s300, 4
          %s328 = int_to_ptr.vmem [resolvable:$true] %s327
          %330 = dma.vmem_to_hbm [thread:$0]  %s328, 32, %s325, %s297
        $region48: #{tpu_custom_call.1} parent=27 // pred_fallthru
          _
      $region28: #{tpu_custom_call.1} parent=5 // pred_fallthru
        _
      %p331 = scmp.le.s32.totalorder 2, %s22
      // Predicated region
      $region49: #{tpu_custom_call.1} parent=5 // pred_check
        %p332 = pneg %p331
      $region50: #{tpu_custom_call.1} parent=5 // pred_check_branch
        %334 = sbr.rel (%p332) target = $region52
      $region51: #{tpu_custom_call.1} parent=5 // pred_region
        %s335 = ssub.s32 %s22, 2
        // Predicated region
        $region53: #{tpu_custom_call.1} parent=51 // pred_check
          %p336 = pneg %p132
        $region54: #{tpu_custom_call.1} parent=51 // pred_check_branch
          %338 = sbr.rel (%p336) target = $region56
        $region55: #{tpu_custom_call.1} parent=51 // pred_region
          %s339 = sand.u32 %s117, 1
          %s340 = scalar_lea.sflag [#allocation4], %s339
          %s341 = sand.u32 %s117, 1
          %s342 = smul.addr %s341, 2
          %s343 = scalar_lea.vmem [#allocation7], %s342
          %344 = dma.done %s340, 32
        $region56: #{tpu_custom_call.1} parent=51 // pred_fallthru
          _
        // Predicated region
        $region57: #{tpu_custom_call.1} parent=51 // pred_check
          %p345 = pneg %p160
        $region58: #{tpu_custom_call.1} parent=51 // pred_check_branch
          %347 = sbr.rel (%p345) target = $region60
        $region59: #{tpu_custom_call.1} parent=51 // pred_region
          %s348 = sand.u32 %s145, 1
          %s349 = scalar_lea.sflag [#allocation9], %s348
          %s350 = sand.u32 %s145, 1
          %s351 = smul.addr %s350, 2
          %s352 = scalar_lea.vmem [#allocation8], %s351
          %353 = dma.done %s349, 32
        $region60: #{tpu_custom_call.1} parent=51 // pred_fallthru
          _
      $region52: #{tpu_custom_call.1} parent=5 // pred_fallthru
        _
    $region6: #{tpu_custom_call.1} parent=1 // loop_footer
      %s26 = sadd.s32 1, %s22
    $region7: #{tpu_custom_call.1} parent=1 // loop_footer_branch
      %21 = sbr.rel target = $region3
    $region8: #{tpu_custom_call.1} parent=1 // loop_exit
      _
    %354 = vsyncpa [#allocation3], 1
    %s355 = scalar_lea.sflag [#allocation3], 1
    %356 = vsyncpa %s355, 1
    %357 = vsyncpa [#allocation6], 1
    %s358 = scalar_lea.sflag [#allocation6], 1
    %359 = vsyncpa %s358, 1
    %360 = vsyncpa [#allocation4], 1
    %s361 = scalar_lea.sflag [#allocation4], 1
    %362 = vsyncpa %s361, 1
    %363 = vsyncpa [#allocation9], 1
    %s364 = scalar_lea.sflag [#allocation9], 1
    %365 = vsyncpa %s364, 1

</llo_original>
